<compile_context>
chip_gen: v7x
topology: tpu7x:2x2x1
jax: 0.10.0
libtpu: 0.0.40
codegen_flags: <defaults>
</compile_context>

<pallas_src>
import functools
import math

import jax
import jax.numpy as jnp
from jax.experimental import pallas as pl
from jax.experimental.pallas import tpu as pltpu


# ----------------------------------------------------------------------------
# Small helpers
# ----------------------------------------------------------------------------
def _round_up(x, m):
    return -(-x // m) * m


def _row_tile(m, pref):
    """Pick a row tile: full array if small, else MXU-friendly `pref` (pad later)."""
    if m <= pref:
        return m, m
    return pref, _round_up(m, pref)


# ----------------------------------------------------------------------------
# Kernel 1: row-tiled linear  y = x @ W + b   (bf16 operands, f32 accumulate).
# Used for the GRU input projection (hoisted out of the time loop).
# ----------------------------------------------------------------------------
def _linear_kernel(x_ref, w_ref, b_ref, o_ref):
    y = jnp.dot(x_ref[...], w_ref[...], preferred_element_type=jnp.float32)
    o_ref[...] = y + b_ref[...]


def tiled_linear(x, w, b, *, tm=256):
    """x: (M, K) bf16, w: (K, N) bf16, b: (1, N) f32 -> (M, N) f32."""
    M, K = x.shape
    N = w.shape[1]
    tm_eff, Mp = _row_tile(M, tm)
    xp = x if Mp == M else jnp.pad(x, ((0, Mp - M), (0, 0)))
    out = pl.pallas_call(
        _linear_kernel,
        out_shape=jax.ShapeDtypeStruct((Mp, N), jnp.float32),
        grid=(Mp // tm_eff,),
        in_specs=[
            pl.BlockSpec((tm_eff, K), lambda i: (i, 0)),
            pl.BlockSpec((K, N), lambda i: (0, 0)),
            pl.BlockSpec((1, N), lambda i: (0, 0)),
        ],
        out_specs=pl.BlockSpec((tm_eff, N), lambda i: (i, 0)),
        compiler_params=pltpu.CompilerParams(dimension_semantics=("parallel",)),
    )(xp, w, b)
    return out if Mp == M else out[:M]


# ----------------------------------------------------------------------------
# Kernel 2: GRU recurrence only (input projection gi = x@Wih+bih precomputed).
# Gridded over batch; returns the last-step hidden state.
# ----------------------------------------------------------------------------
def _gru_kernel(gi_ref, whh_ref, bhh_ref, h_ref, *, seq_len, hid):
    tb = gi_ref.shape[1]

    def step(t, h):
        gi = gi_ref[t]                                               # (tb, 3H) f32
        gh = jnp.dot(h.astype(jnp.bfloat16), whh_ref[...],
                     preferred_element_type=jnp.float32) + bhh_ref[...]
        i_r, i_z, i_n = gi[:, :hid], gi[:, hid:2 * hid], gi[:, 2 * hid:]
        h_r, h_z, h_n = gh[:, :hid], gh[:, hid:2 * hid], gh[:, 2 * hid:]
        r = jax.nn.sigmoid(i_r + h_r)
        z = jax.nn.sigmoid(i_z + h_z)
        n = jnp.tanh(i_n + r * h_n)
        return (1.0 - z) * n + z * h

    h0 = jnp.zeros((tb, hid), jnp.float32)
    h_ref[...] = jax.lax.fori_loop(0, seq_len, step, h0, unroll=True)


def gru_last_hidden(gi, whh, bhh, hid, *, tb=8):
    """gi: (S, B, 3H) f32 time-major pre-projected inputs -> (B, H) f32."""
    S, B, G = gi.shape
    tb_eff = tb if (B > tb and B % tb == 0) else B
    return pl.pallas_call(
        functools.partial(_gru_kernel, seq_len=S, hid=hid),
        out_shape=jax.ShapeDtypeStruct((B, hid), jnp.float32),
        grid=(B // tb_eff,),
        in_specs=[
            pl.BlockSpec((S, tb_eff, G), lambda i: (0, i, 0)),
            pl.BlockSpec((hid, G), lambda i: (0, 0)),
            pl.BlockSpec((1, G), lambda i: (0, 0)),
        ],
        out_specs=pl.BlockSpec((tb_eff, hid), lambda i: (i, 0)),
        compiler_params=pltpu.CompilerParams(dimension_semantics=("parallel",)),
    )(gi, whh, bhh)


# ----------------------------------------------------------------------------
# Kernel 3: fused 4-layer Generator (Linear+BN+LeakyReLU x3, Linear+ReLU),
# gridded over rows of the noise; all weights stay resident in VMEM.
# ----------------------------------------------------------------------------
def _generator_kernel(z_ref, w1_ref, b1_ref, w2_ref, b2_ref,
                      w3_ref, b3_ref, w4_ref, b4_ref, o_ref):
    def leaky(x):
        return jnp.where(x >= 0.0, x, 0.2 * x)                      # LeakyReLU(0.2)

    h = jnp.dot(z_ref[...], w1_ref[...], preferred_element_type=jnp.float32) + b1_ref[...]
    h = leaky(h)
    h = jnp.dot(h.astype(jnp.bfloat16), w2_ref[...],
                preferred_element_type=jnp.float32) + b2_ref[...]
    h = leaky(h)
    h = jnp.dot(h.astype(jnp.bfloat16), w3_ref[...],
                preferred_element_type=jnp.float32) + b3_ref[...]
    h = leaky(h)
    h = jnp.dot(h.astype(jnp.bfloat16), w4_ref[...],
                preferred_element_type=jnp.float32) + b4_ref[...]
    o_ref[...] = jnp.maximum(h, 0.0)


def generator_forward(v_z, p, *, tm=256):
    """v_z: (M, H//8) bf16 noise -> (M, 2H) f32 generated features."""
    M, nz = v_z.shape
    H = p["num_hid"]
    tm_eff, Mp = _row_tile(M, tm)
    z_in = v_z if Mp == M else jnp.pad(v_z, ((0, Mp - M), (0, 0)))
    out = pl.pallas_call(
        _generator_kernel,
        out_shape=jax.ShapeDtypeStruct((Mp, 2 * H), jnp.float32),
        grid=(Mp // tm_eff,),
        in_specs=[
            pl.BlockSpec((tm_eff, nz), lambda i: (i, 0)),
            pl.BlockSpec((nz, H // 4), lambda i: (0, 0)),
            pl.BlockSpec((1, H // 4), lambda i: (0, 0)),
            pl.BlockSpec((H // 4, H // 2), lambda i: (0, 0)),
            pl.BlockSpec((1, H // 2), lambda i: (0, 0)),
            pl.BlockSpec((H // 2, H), lambda i: (0, 0)),
            pl.BlockSpec((1, H), lambda i: (0, 0)),
            pl.BlockSpec((H, 2 * H), lambda i: (0, 0)),
            pl.BlockSpec((1, 2 * H), lambda i: (0, 0)),
        ],
        out_specs=pl.BlockSpec((tm_eff, 2 * H), lambda i: (i, 0)),
        compiler_params=pltpu.CompilerParams(dimension_semantics=("parallel",)),
    )(z_in, p["g1_w"], p["g1_b"], p["g2_w"], p["g2_b"],
      p["g3_w"], p["g3_b"], p["g4_w"], p["g4_b"])
    return out if Mp == M else out[:M]


# ----------------------------------------------------------------------------
# Kernel 4: NewAttention + softmax over boxes + attention-weighted pooling,
# gridded over batch.  The 1-wide attention projection is a VPU reduction
# (no lane-1 MXU matmul / masked stores).
# ----------------------------------------------------------------------------
def _attention_kernel(v_ref, q_ref, wv_ref, bv_ref, wq_ref, bq_ref, wa_ref, o_ref):
    v = v_ref[...]                                                   # (tb, K, F) f32
    vp = jnp.einsum("bkf,fh->bkh", v.astype(jnp.bfloat16), wv_ref[...],
                    preferred_element_type=jnp.float32) + bv_ref[...]
    vp = jnp.maximum(vp, 0.0)                                        # (tb, K, H)
    qp = jnp.dot(q_ref[...].astype(jnp.bfloat16), wq_ref[...],
                 preferred_element_type=jnp.float32) + bq_ref[...]
    qp = jnp.maximum(qp, 0.0)                                        # (tb, H)
    joint = vp * qp[:, None, :]                                      # (tb, K, H)
    # Linear(H -> 1) as a lane reduction; its bias cancels in softmax over boxes.
    logits = jnp.sum(joint * wa_ref[...], axis=-1)                   # (tb, K)
    m = jnp.max(logits, axis=-1, keepdims=True)
    e = jnp.exp(logits - m)
    att = e / jnp.sum(e, axis=-1, keepdims=True)                     # softmax over boxes
    o_ref[...] = jnp.sum(att[:, :, None] * v, axis=1)                # (tb, F)


def attention_pool(v, q_emb, p, *, tb=8):
    B, K, F = v.shape
    H = q_emb.shape[1]
    tb_eff = tb if (B > tb and B % tb == 0) else B
    return pl.pallas_call(
        _attention_kernel,
        out_shape=jax.ShapeDtypeStruct((B, F), jnp.float32),
        grid=(B // tb_eff,),
        in_specs=[
            pl.BlockSpec((tb_eff, K, F), lambda i: (i, 0, 0)),
            pl.BlockSpec((tb_eff, H), lambda i: (i, 0)),
            pl.BlockSpec((F, H), lambda i: (0, 0)),
            pl.BlockSpec((1, H), lambda i: (0, 0)),
            pl.BlockSpec((H, H), lambda i: (0, 0)),
            pl.BlockSpec((1, H), lambda i: (0, 0)),
            pl.BlockSpec((1, H), lambda i: (0, 0)),
        ],
        out_specs=pl.BlockSpec((tb_eff, F), lambda i: (i, 0)),
        compiler_params=pltpu.CompilerParams(dimension_semantics=("parallel",)),
    )(v, q_emb, p["att_wv"], p["att_bv"], p["att_wq"], p["att_bq"], p["att_wa"])


# ----------------------------------------------------------------------------
# Kernel 5: fused tail  q_net, v_net, elementwise joint, classifier L1+ReLU, L2.
# Grid = (row tiles, classifier-column tiles); the hidden activation is computed
# once per row tile (j == 0) and kept in VMEM scratch while the big classifier
# weight streams in N-tiles.
# ----------------------------------------------------------------------------
def _tail_kernel(q_ref, v_ref, wqn_ref, bqn_ref, wvn_ref, bvn_ref,
                 w1_ref, b1_ref, w2_ref, b2_ref, o_ref, hid_ref):
    @pl.when(pl.program_id(1) == 0)
    def _():
        q_repr = jnp.maximum(
            jnp.dot(q_ref[...].astype(jnp.bfloat16), wqn_ref[...],
                    preferred_element_type=jnp.float32) + bqn_ref[...], 0.0)
        v_repr = jnp.maximum(
            jnp.dot(v_ref[...].astype(jnp.bfloat16), wvn_ref[...],
                    preferred_element_type=jnp.float32) + bvn_ref[...], 0.0)
        joint = q_repr * v_repr
        hid_ref[...] = jnp.maximum(
            jnp.dot(joint.astype(jnp.bfloat16), w1_ref[...],
                    preferred_element_type=jnp.float32) + b1_ref[...], 0.0)

    o_ref[...] = (jnp.dot(hid_ref[...].astype(jnp.bfloat16), w2_ref[...],
                          preferred_element_type=jnp.float32) + b2_ref[...])


def classifier_tail(q_emb, v_emb, p, *, tm=256, tn=512):
    B, H = q_emb.shape
    F = v_emb.shape[1]
    A = p["cls_w2"].shape[1]
    tm_eff, Bp = _row_tile(B, tm)
    tn_eff, Ap = _row_tile(A, tn)

    q_in = q_emb if Bp == B else jnp.pad(q_emb, ((0, Bp - B), (0, 0)))
    v_in = v_emb if Bp == B else jnp.pad(v_emb, ((0, Bp - B), (0, 0)))
    w2 = p["cls_w2"] if Ap == A else jnp.pad(p["cls_w2"], ((0, 0), (0, Ap - A)))
    b2 = p["cls_b2"] if Ap == A else jnp.pad(p["cls_b2"], ((0, 0), (0, Ap - A)))

    out = pl.pallas_call(
        _tail_kernel,
        out_shape=jax.ShapeDtypeStruct((Bp, Ap), jnp.float32),
        grid=(Bp // tm_eff, Ap // tn_eff),
        in_specs=[
            pl.BlockSpec((tm_eff, H), lambda i, j: (i, 0)),
            pl.BlockSpec((tm_eff, F), lambda i, j: (i, 0)),
            pl.BlockSpec((H, H), lambda i, j: (0, 0)),
            pl.BlockSpec((1, H), lambda i, j: (0, 0)),
            pl.BlockSpec((F, H), lambda i, j: (0, 0)),
            pl.BlockSpec((1, H), lambda i, j: (0, 0)),
            pl.BlockSpec((H, 2 * H), lambda i, j: (0, 0)),
            pl.BlockSpec((1, 2 * H), lambda i, j: (0, 0)),
            pl.BlockSpec((2 * H, tn_eff), lambda i, j: (0, j)),
            pl.BlockSpec((1, tn_eff), lambda i, j: (0, j)),
        ],
        out_specs=pl.BlockSpec((tm_eff, tn_eff), lambda i, j: (i, j)),
        scratch_shapes=[pltpu.VMEM((tm_eff, 2 * H), jnp.float32)],
        compiler_params=pltpu.CompilerParams(
            dimension_semantics=("parallel", "arbitrary")),
    )(q_in, v_in, p["qnet_w"], p["qnet_b"], p["vnet_w"], p["vnet_b"],
      p["cls_w1"], p["cls_b1"], w2, b2)
    return out[:B, :A]


# ----------------------------------------------------------------------------
# Full model forward.
# ----------------------------------------------------------------------------
def bia_model_forward(p, v, q, v_mask, noise_key, gen=True):
    # TODO(synk): config.css branch (per-sample masked scatter of generated boxes)
    # is not implemented; this is the css=False path where v_mask is unused.
    del v_mask
    B, Kb, F = v.shape
    H = p["num_hid"]
    S = q.shape[1]
    EP = p["emb_dim_padded"]

    # WordEmbedding gather (plain-JAX glue), time-major so the GRU kernel
    # indexes the leading axis.  Dropout(0.0) is identity.
    w_emb = jnp.take(p["w_emb"], q.T, axis=0)                        # (S, B, EP) bf16

    # GRU input projection hoisted out of the recurrence: one big MXU matmul.
    gi = tiled_linear(w_emb.reshape(S * B, EP), p["gru_wih"], p["gru_bih"])
    gi = gi.reshape(S, B, 3 * H)                                     # (S, B, 3H) f32
    q_emb = gru_last_hidden(gi, p["gru_whh"], p["gru_bhh"], H)       # (B, H) f32

    if gen:
        # css=False: v is fully regenerated from noise (input v is discarded).
        nz = H // 8  # PyTorch hard-codes 128 == num_hid // 8 for num_hid == 1024
        v_z = jax.random.normal(noise_key, (B * Kb, nz), jnp.float32).astype(jnp.bfloat16)
        # TODO(synk): noise could be drawn in-kernel via pltpu.prng_* to skip one
        # small HBM round trip; kept host-side jax.random for exact determinism.
        v = generator_forward(v_z, p).reshape(B, Kb, F)

    v_emb = attention_pool(v, q_emb, p)                              # (B, F) f32
    return classifier_tail(q_emb, v_emb, p)                          # (B, num_ans)


# ----------------------------------------------------------------------------
# Deterministic synthetic parameter init (kaiming scales, zero biases).
# weight_norm folded into effective weights; BatchNorm1d(eps=0.8) folded in
# eval mode (running_mean=0, running_var=1, gamma=1, beta=0).
# Matmul weights stored bf16; biases / vector-only params stored f32.
# ----------------------------------------------------------------------------
def _kaiming(k, fan_in, fan_out, scale=1.0):
    std = math.sqrt(2.0 / fan_in)
    return (scale * std) * jax.random.normal(k, (fan_in, fan_out), jnp.float32)


def init_params(key, ntoken, num_hid, v_dim, num_ans, emb_dim=300):
    keys = iter(jax.random.split(key, 16))
    H = num_hid
    EP = _round_up(emb_dim, 128)           # pad embedding dim to the lane width
    p = {"num_hid": H, "emb_dim_padded": EP}

    # WordEmbedding(ntoken, 300, 0.0): Embedding(ntoken+1, 300, padding_idx=ntoken)
    emb = 0.1 * jax.random.normal(next(keys), (ntoken + 1, emb_dim), jnp.float32)
    emb = emb.at[ntoken].set(0.0)
    p["w_emb"] = jnp.pad(emb, ((0, 0), (0, EP - emb_dim))).astype(jnp.bfloat16)

    # QuestionEmbedding: GRU(300 -> H, 1 layer, unidirectional); gate order [r,z,n]
    s = 1.0 / math.sqrt(H)
    wih = jax.random.uniform(next(keys), (emb_dim, 3 * H), jnp.float32, -s, s)
    p["gru_wih"] = jnp.pad(wih, ((0, EP - emb_dim), (0, 0))).astype(jnp.bfloat16)
    p["gru_whh"] = jax.random.uniform(next(keys), (H, 3 * H), jnp.float32, -s, s
                                      ).astype(jnp.bfloat16)
    p["gru_bih"] = jnp.zeros((1, 3 * H), jnp.float32)
    p["gru_bhh"] = jnp.zeros((1, 3 * H), jnp.float32)

    # NewAttention(v_dim, H, H): v_proj FCNet, q_proj FCNet, linear(H -> 1)
    p["att_wv"] = _kaiming(next(keys), v_dim, H).astype(jnp.bfloat16)
    p["att_bv"] = jnp.zeros((1, H), jnp.float32)
    p["att_wq"] = _kaiming(next(keys), H, H).astype(jnp.bfloat16)
    p["att_bq"] = jnp.zeros((1, H), jnp.float32)
    p["att_wa"] = _kaiming(next(keys), H, 1).reshape(1, H)   # f32 row vector (VPU reduce)
    # att linear bias omitted: a constant added to every box logit cancels in softmax(dim=1).

    # q_net = FCNet([H, H]), v_net = FCNet([v_dim, H])
    p["qnet_w"] = _kaiming(next(keys), H, H).astype(jnp.bfloat16)
    p["qnet_b"] = jnp.zeros((1, H), jnp.float32)
    p["vnet_w"] = _kaiming(next(keys), v_dim, H).astype(jnp.bfloat16)
    p["vnet_b"] = jnp.zeros((1, H), jnp.float32)

    # SimpleClassifier(H, 2H, num_ans, 0.5)
    p["cls_w1"] = _kaiming(next(keys), H, 2 * H).astype(jnp.bfloat16)
    p["cls_b1"] = jnp.zeros((1, 2 * H), jnp.float32)
    p["cls_w2"] = _kaiming(next(keys), 2 * H, num_ans).astype(jnp.bfloat16)
    p["cls_b2"] = jnp.zeros((1, num_ans), jnp.float32)

    # Generator: block(H//8,H//4) block(H//4,H//2) block(H//2,H) Linear(H,2H) ReLU
    bn = 1.0 / math.sqrt(1.0 + 0.8)  # eval-mode BatchNorm1d(out, eps=0.8) fold
    p["g1_w"] = _kaiming(next(keys), H // 8, H // 4, bn).astype(jnp.bfloat16)
    p["g1_b"] = jnp.zeros((1, H // 4), jnp.float32)
    p["g2_w"] = _kaiming(next(keys), H // 4, H // 2, bn).astype(jnp.bfloat16)
    p["g2_b"] = jnp.zeros((1, H // 2), jnp.float32)
    p["g3_w"] = _kaiming(next(keys), H // 2, H, bn).astype(jnp.bfloat16)
    p["g3_b"] = jnp.zeros((1, H), jnp.float32)
    p["g4_w"] = _kaiming(next(keys), H, 2 * H).astype(jnp.bfloat16)
    p["g4_b"] = jnp.zeros((1, 2 * H), jnp.float32)
    return p


if __name__ == "__main__":
    B, NUM_BOXES, SEQ = 2, 16, 8
    NUM_HID = 32
    V_DIM = NUM_HID * 2      # generator maps to num_hid*2 and reshapes to v_dim
    NTOKEN = 50
    NUM_ANS = 16

    params = init_params(jax.random.PRNGKey(0), NTOKEN, NUM_HID, V_DIM, NUM_ANS)

    kq, kv, knoise = jax.random.split(jax.random.PRNGKey(0), 3)
    q = jax.random.randint(kq, (B, SEQ), 0, NTOKEN)
    v = jax.random.normal(kv, (B, NUM_BOXES, V_DIM), jnp.float32)
    v_mask = jnp.ones((B, NUM_BOXES), jnp.float32)

    logits = bia_model_forward(params, v, q, v_mask, noise_key=knoise, gen=True)
    logits = jax.block_until_ready(logits)
    assert logits.shape == (B, NUM_ANS), logits.shape
    assert bool(jnp.all(jnp.isfinite(logits)))
    print("KERNEL_OK")
</pallas_src>

<mosaic_0001>
module attributes {stable_mosaic.version = 11 : i64} {
  func.func @_linear_kernel(%arg0: i32, %arg1: memref<16x384xbf16, #tpu.memory_space<vmem>>, %arg2: memref<384x96xbf16, #tpu.memory_space<vmem>>, %arg3: memref<1x96xf32, #tpu.memory_space<vmem>>, %arg4: memref<16x96xf32, #tpu.memory_space<vmem>>) attributes {dimension_semantics = [#tpu.dimension_semantics<parallel>], iteration_bounds = array<i64: 1>, scalar_prefetch = 0 : i64, scratch_operands = 0 : i64, tpu.core_type = #tpu.core_type<tc>, window_params = [{transform_indices = @transform_0, window_bounds = array<i64: 16, 384>}, {pipeline_mode = #tpu.pipeline_mode<synchronous>, transform_indices = @transform_1, window_bounds = array<i64: 384, 96>}, {pipeline_mode = #tpu.pipeline_mode<synchronous>, transform_indices = @transform_2, window_bounds = array<i64: 1, 96>}, {transform_indices = @transform_3, window_bounds = array<i64: 16, 96>}]} {
    %c0 = arith.constant 0 : index
    %c0_0 = arith.constant 0 : index
    %0 = vector.load %arg1[%c0, %c0_0] : memref<16x384xbf16, #tpu.memory_space<vmem>>, vector<16x384xbf16>
    %c0_1 = arith.constant 0 : index
    %c0_2 = arith.constant 0 : index
    %1 = vector.load %arg2[%c0_1, %c0_2] : memref<384x96xbf16, #tpu.memory_space<vmem>>, vector<384x96xbf16>
    %cst = arith.constant dense<0.000000e+00> : vector<16x96xf32>
    %2 = tpu.matmul %0, %1, %cst {dimension_numbers = #tpu.dot_dimension_numbers<[1], [0], [0], [1], [0, 0, 1, 1], [], []>} : vector<16x384xbf16>, vector<384x96xbf16>, vector<16x96xf32> -> vector<16x96xf32>
    %c0_3 = arith.constant 0 : index
    %c0_4 = arith.constant 0 : index
    %3 = vector.load %arg3[%c0_3, %c0_4] : memref<1x96xf32, #tpu.memory_space<vmem>>, vector<1x96xf32>
    %4 = vector.broadcast %3 : vector<1x96xf32> to vector<16x96xf32>
    %5 = arith.addf %2, %4 : vector<16x96xf32>
    %c0_5 = arith.constant 0 : index
    %c0_6 = arith.constant 0 : index
    %6 = vector.load %arg4[%c0_5, %c0_6] : memref<16x96xf32, #tpu.memory_space<vmem>>, vector<16x96xf32>
    tpu.vector_store %arg4[%c0_5, %c0_6], %5 {strides = array<i32>} : memref<16x96xf32, #tpu.memory_space<vmem>>, vector<16x96xf32>,
    return
  }
  func.func @transform_0(%arg0: i32) -> (i32, i32) {
    %c0_i32 = arith.constant 0 : i32
    %c0_i32_0 = arith.constant 0 : i32
    return %arg0, %c0_i32 : i32, i32
  }
  func.func @transform_1(%arg0: i32) -> (i32, i32) {
    %c0_i32 = arith.constant 0 : i32
    %c0_i32_0 = arith.constant 0 : i32
    %c0_i32_1 = arith.constant 0 : i32
    return %c0_i32, %c0_i32_0 : i32, i32
  }
  func.func @transform_2(%arg0: i32) -> (i32, i32) {
    %c0_i32 = arith.constant 0 : i32
    %c0_i32_0 = arith.constant 0 : i32
    %c0_i32_1 = arith.constant 0 : i32
    return %c0_i32, %c0_i32_0 : i32, i32
  }
  func.func @transform_3(%arg0: i32) -> (i32, i32) {
    %c0_i32 = arith.constant 0 : i32
    %c0_i32_0 = arith.constant 0 : i32
    return %arg0, %c0_i32 : i32, i32
  }
}

</mosaic_0001>

<llo_original>
// kernel: tpu_custom_call.1
$region0: #{tpu_custom_call.1}
  #allocation0 [shape = 'u32[]', space=smem, size = 0x4, offset = 0x4, fixed_abs, tag = 'smem constant byte address 0x4 - core index']
  #allocation1 [shape = 'u32[144,128]{1,0:T(1,128)}', space=vmem, size = 0x12000, scoped, tag = 'internal scratch']
  %s0 = inlined_call_operand.vmem [shape: bf16[16,384], index: 0, kind: input, shape index: {}]
  %s1 = inlined_call_operand.vmem [shape: bf16[384,96], index: 1, kind: input, shape index: {}]
  %s2 = inlined_call_operand.vmem [shape: f32[1,96], index: 2, kind: input, shape index: {}]
  %s3 = inlined_call_operand.hbm [shape: f32[16,96], index: 3, kind: output, shape index: {}]
  %s4 = sld [smem:[#allocation0]]
  $region22: #{tpu_custom_call.1} parent=0
    _
  %s6 = ssub.s32 1, %s4
  %s7 = scalar_select 0, %s6, %s4
  $region1: #{tpu_custom_call.1} parent=0
    #allocation2 [shape = 'u8[8192]{0}', space=vmem, size = 0x2000, scoped, tag = 'output window, operand 0, single buffered']
    #allocation3 [shape = 's32[1]{0}', space=sflag, size = 0x4, scoped, tag = 'scoped memory for tpu_custom_call.1']
    %8 = vsyncpa [#allocation3], 0
    // Predicated region
    $region2: #{tpu_custom_call.1} parent=1 // pred_check
      _
    $region3: #{tpu_custom_call.1} parent=1 // pred_check_branch
      %10 = sbr.rel (0) target = $region5
    $region4: #{tpu_custom_call.1} parent=1 // pred_region
      _
    $region5: #{tpu_custom_call.1} parent=1 // pred_fallthru
      _
    // Predicated region
    $region6: #{tpu_custom_call.1} parent=1 // pred_check
      _
    $region7: #{tpu_custom_call.1} parent=1 // pred_check_branch
      %12 = sbr.rel (0) target = $region9
    $region8: #{tpu_custom_call.1} parent=1 // pred_region
      _
    $region9: #{tpu_custom_call.1} parent=1 // pred_fallthru
      _
    // Predicated region
    $region10: #{tpu_custom_call.1} parent=1 // pred_check
      _
    $region11: #{tpu_custom_call.1} parent=1 // pred_check_branch
      %14 = sbr.rel (0) target = $region13
    $region12: #{tpu_custom_call.1} parent=1 // pred_region
      _
    $region13: #{tpu_custom_call.1} parent=1 // pred_fallthru
      _
    %v16 = vld [vmem:[%s0] sm:$0xff]
    %v17 = vld [vmem:[%s0 + $0x8] sm:$0xf]
    %v18 = vld [vmem:[%s0 + $0xc] sm:$0xff]
    %v19 = vld [vmem:[%s0 + $0x14] sm:$0xf]
    %v20 = vld [vmem:[%s1] sm:$0xf]
    %v21 = vld [vmem:[%s1 + $0x4] sm:$0xf]
    %v22 = vld [vmem:[%s1 + $0x8] sm:$0xf]
    %v23 = vld [vmem:[%s1 + $0xc] sm:$0xf]
    %v24 = vld [vmem:[%s1 + $0x10] sm:$0xf]
    %v25 = vld [vmem:[%s1 + $0x14] sm:$0xf]
    %v26 = vld [vmem:[%s1 + $0x18] sm:$0xf]
    %v27 = vld [vmem:[%s1 + $0x1c] sm:$0xf]
    %v28 = vld [vmem:[%s1 + $0x20] sm:$0xf]
    %v29 = vld [vmem:[%s1 + $0x24] sm:$0xf]
    %v30 = vld [vmem:[%s1 + $0x28] sm:$0xf]
    %v31 = vld [vmem:[%s1 + $0x2c] sm:$0xf]
    %v32 = vld [vmem:[%s1 + $0x30] sm:$0xf]
    %v33 = vld [vmem:[%s1 + $0x34] sm:$0xf]
    %v34 = vld [vmem:[%s1 + $0x38] sm:$0xf]
    %v35 = vld [vmem:[%s1 + $0x3c] sm:$0xf]
    %v36 = vld [vmem:[%s1 + $0x40] sm:$0xf]
    %v37 = vld [vmem:[%s1 + $0x44] sm:$0xf]
    %v38 = vld [vmem:[%s1 + $0x48] sm:$0xf]
    %v39 = vld [vmem:[%s1 + $0x4c] sm:$0xf]
    %v40 = vld [vmem:[%s1 + $0x50] sm:$0xf]
    %v41 = vld [vmem:[%s1 + $0x54] sm:$0xf]
    %v42 = vld [vmem:[%s1 + $0x58] sm:$0xf]
    %v43 = vld [vmem:[%s1 + $0x5c] sm:$0xf]
    %v44 = vld [vmem:[%s1 + $0x60] sm:$0xf]
    %v45 = vld [vmem:[%s1 + $0x64] sm:$0xf]
    %v46 = vld [vmem:[%s1 + $0x68] sm:$0xf]
    %v47 = vld [vmem:[%s1 + $0x6c] sm:$0xf]
    %v48 = vld [vmem:[%s1 + $0x70] sm:$0xf]
    %v49 = vld [vmem:[%s1 + $0x74] sm:$0xf]
    %v50 = vld [vmem:[%s1 + $0x78] sm:$0xf]
    %v51 = vld [vmem:[%s1 + $0x7c] sm:$0xf]
    %v52 = vld [vmem:[%s1 + $0x80] sm:$0xf]
    %v53 = vld [vmem:[%s1 + $0x84] sm:$0xf]
    %v54 = vld [vmem:[%s1 + $0x88] sm:$0xf]
    %v55 = vld [vmem:[%s1 + $0x8c] sm:$0xf]
    %v56 = vld [vmem:[%s1 + $0x90] sm:$0xf]
    %v57 = vld [vmem:[%s1 + $0x94] sm:$0xf]
    %v58 = vld [vmem:[%s1 + $0x98] sm:$0xf]
    %v59 = vld [vmem:[%s1 + $0x9c] sm:$0xf]
    %v60 = vld [vmem:[%s1 + $0xa0] sm:$0xf]
    %v61 = vld [vmem:[%s1 + $0xa4] sm:$0xf]
    %v62 = vld [vmem:[%s1 + $0xa8] sm:$0xf]
    %v63 = vld [vmem:[%s1 + $0xac] sm:$0xf]
    %v64 = vld [vmem:[%s1 + $0xb0] sm:$0xf]
    %v65 = vld [vmem:[%s1 + $0xb4] sm:$0xf]
    %v66 = vld [vmem:[%s1 + $0xb8] sm:$0xf]
    %v67 = vld [vmem:[%s1 + $0xbc] sm:$0xf]
    %v68 = vld [vmem:[%s2] sm:$0x1]
    %v70 = vlaneseq
    %v71 = vshrl.u32 %v70, 7
    %v72 = vsub.s32 0, %v71
    %v73 = vrot.slane %v68, %v72
    %v79 = vunpack.c.l.b16 %v16
    %v80 = vunpack.c.h.b16 %v16
    %v81 = vunpack.c.l.b16 %v17
    %v82 = vunpack.c.l.b16 %v18
    %v83 = vunpack.c.h.b16 %v18
    %v84 = vunpack.c.l.b16 %v19
    %v85 = vpack.c.b16 %v82, %v79
    %v86 = vpack.c.b16 %v83, %v80
    %v87 = vpack.c.b16 %v84, %v81
    %v139 = vunpack.c.l.b16 %v20
    %v140 = vunpack.c.l.b16 %v21
    %v141 = vunpack.c.l.b16 %v22
    %v142 = vunpack.c.l.b16 %v23
    %v143 = vunpack.c.l.b16 %v24
    %v144 = vunpack.c.l.b16 %v25
    %v145 = vunpack.c.l.b16 %v26
    %v146 = vunpack.c.l.b16 %v27
    %v147 = vunpack.c.l.b16 %v28
    %v148 = vunpack.c.l.b16 %v29
    %v149 = vunpack.c.l.b16 %v30
    %v150 = vunpack.c.l.b16 %v31
    %v151 = vunpack.c.l.b16 %v32
    %v152 = vunpack.c.l.b16 %v33
    %v153 = vunpack.c.l.b16 %v34
    %v154 = vunpack.c.l.b16 %v35
    %v155 = vunpack.c.l.b16 %v36
    %v156 = vunpack.c.l.b16 %v37
    %v157 = vunpack.c.l.b16 %v38
    %v158 = vunpack.c.l.b16 %v39
    %v159 = vunpack.c.l.b16 %v40
    %v160 = vunpack.c.l.b16 %v41
    %v161 = vunpack.c.l.b16 %v42
    %v162 = vunpack.c.l.b16 %v43
    %v163 = vunpack.c.l.b16 %v44
    %v164 = vunpack.c.l.b16 %v45
    %v165 = vunpack.c.l.b16 %v46
    %v166 = vunpack.c.l.b16 %v47
    %v167 = vunpack.c.l.b16 %v48
    %v168 = vunpack.c.l.b16 %v49
    %v169 = vunpack.c.l.b16 %v50
    %v170 = vunpack.c.l.b16 %v51
    %v171 = vunpack.c.l.b16 %v52
    %v172 = vunpack.c.l.b16 %v53
    %v173 = vunpack.c.l.b16 %v54
    %v174 = vunpack.c.l.b16 %v55
    %v175 = vunpack.c.l.b16 %v56
    %v176 = vunpack.c.l.b16 %v57
    %v177 = vunpack.c.l.b16 %v58
    %v178 = vunpack.c.l.b16 %v59
    %v179 = vunpack.c.l.b16 %v60
    %v180 = vunpack.c.l.b16 %v61
    %v181 = vunpack.c.l.b16 %v62
    %v182 = vunpack.c.l.b16 %v63
    %v183 = vunpack.c.l.b16 %v64
    %v184 = vunpack.c.l.b16 %v65
    %v185 = vunpack.c.l.b16 %v66
    %v186 = vunpack.c.l.b16 %v67
    %v187 = vpack.c.b16 %v140, %v139
    %v188 = vpack.c.b16 %v142, %v141
    %v189 = vpack.c.b16 %v144, %v143
    %v190 = vpack.c.b16 %v146, %v145
    %v191 = vpack.c.b16 %v148, %v147
    %v192 = vpack.c.b16 %v150, %v149
    %v193 = vpack.c.b16 %v152, %v151
    %v194 = vpack.c.b16 %v154, %v153
    %v195 = vpack.c.b16 %v156, %v155
    %v196 = vpack.c.b16 %v158, %v157
    %v197 = vpack.c.b16 %v160, %v159
    %v198 = vpack.c.b16 %v162, %v161
    %v199 = vpack.c.b16 %v164, %v163
    %v200 = vpack.c.b16 %v166, %v165
    %v201 = vpack.c.b16 %v168, %v167
    %v202 = vpack.c.b16 %v170, %v169
    %v203 = vpack.c.b16 %v172, %v171
    %v204 = vpack.c.b16 %v174, %v173
    %v205 = vpack.c.b16 %v176, %v175
    %v206 = vpack.c.b16 %v178, %v177
    %v207 = vpack.c.b16 %v180, %v179
    %v208 = vpack.c.b16 %v182, %v181
    %v209 = vpack.c.b16 %v184, %v183
    %v210 = vpack.c.b16 %v186, %v185
    %235 = vmatprep.subr.bf16.mxu0 0
    %236 = vmatpush1.bf16.msra.mxu0 %v187
    %237 = vmatprep.subr.bf16.mxu0 0
    %238 = vmatpush1.bf16.msra.mxu0 %v188
    %239 = vmatprep.subr.bf16.mxu0 0
    %240 = vmatpush1.bf16.msra.mxu0 %v189
    %241 = vmatprep.subr.bf16.mxu0 0
    %242 = vmatpush1.bf16.msra.mxu0 %v190
    %243 = vmatprep.subr.bf16.mxu0 0
    %244 = vmatpush1.bf16.msra.mxu0 %v191
    %245 = vmatprep.subr.bf16.mxu0 0
    %246 = vmatpush1.bf16.msra.mxu0 %v192
    %247 = vmatprep.subr.bf16.mxu0 0
    %248 = vmatpush1.bf16.msra.mxu0 %v193
    %249 = vmatprep.subr.bf16.mxu0 0
    %250 = vmatpush1.bf16.msra.mxu0 %v194
    %251 = vmatprep.subr.bf16.mxu0 0
    %252 = vmatpush1.bf16.msra.mxu0 %v195
    %253 = vmatprep.subr.bf16.mxu0 0
    %254 = vmatpush1.bf16.msra.mxu0 %v196
    %255 = vmatprep.subr.bf16.mxu0 0
    %256 = vmatpush1.bf16.msra.mxu0 %v197
    %257 = vmatprep.subr.bf16.mxu0 0
    %258 = vmatpush1.bf16.msra.mxu0 %v198
    %259 = vmatprep.subr.bf16.mxu0 0
    %260 = vmatpush1.bf16.msra.mxu0 %v199
    %261 = vmatprep.subr.bf16.mxu0 0
    %262 = vmatpush1.bf16.msra.mxu0 %v200
    %263 = vmatprep.subr.bf16.mxu0 0
    %264 = vmatpush1.bf16.msra.mxu0 %v201
    %265 = vmatprep.subr.bf16.mxu0 0
    %266 = vmatpush1.bf16.msra.mxu0 %v202
    %267 = vmatprep.mubr.bf16.mxu0 %v86
    %268 = vmatmul.mubr.bf16.gmra.mrb[0].mxu0 %v85
    %v269 = vpop.f32.mrb[0].mxu0
    %v270 = vadd.f32 %v73, %v269
    %v271 = vpop.f32.mrb[0].mxu0
    %v272 = vpop.f32.mrb[0].mxu0
    %v273 = vadd.f32 %v73, %v272
    %v274 = vpop.f32.mrb[0].mxu0
    %275 = vdwg.mxu0
    %276 = vmatprep.subr.bf16.mxu0 0
    %277 = vmatpush1.bf16.msra.mxu0 %v203
    %278 = vmatprep.subr.bf16.mxu0 0
    %279 = vmatpush1.bf16.msra.mxu0 %v204
    %280 = vmatprep.subr.bf16.mxu0 0
    %281 = vmatpush1.bf16.msra.mxu0 %v205
    %282 = vmatprep.subr.bf16.mxu0 0
    %283 = vmatpush1.bf16.msra.mxu0 %v206
    %284 = vmatprep.subr.bf16.mxu0 0
    %285 = vmatpush1.bf16.msra.mxu0 %v207
    %286 = vmatprep.subr.bf16.mxu0 0
    %287 = vmatpush1.bf16.msra.mxu0 %v208
    %288 = vmatprep.subr.bf16.mxu0 0
    %289 = vmatpush1.bf16.msra.mxu0 %v209
    %290 = vmatprep.subr.bf16.mxu0 0
    %291 = vmatpush1.bf16.msra.mxu0 %v210
    %292 = vmatprep.subr.bf16.mxu0 0
    %293 = vmatpush1.bf16.msra.mxu0 0
    %294 = vmatprep.subr.bf16.mxu0 0
    %295 = vmatpush1.bf16.msra.mxu0 0
    %296 = vmatprep.subr.bf16.mxu0 0
    %297 = vmatpush1.bf16.msra.mxu0 0
    %298 = vmatprep.subr.bf16.mxu0 0
    %299 = vmatpush1.bf16.msra.mxu0 0
    %300 = vmatprep.subr.bf16.mxu0 0
    %301 = vmatpush1.bf16.msra.mxu0 0
    %302 = vmatprep.subr.bf16.mxu0 0
    %303 = vmatpush1.bf16.msra.mxu0 0
    %304 = vmatprep.subr.bf16.mxu0 0
    %305 = vmatpush1.bf16.msra.mxu0 0
    %306 = vmatprep.subr.bf16.mxu0 0
    %307 = vmatpush1.bf16.msra.mxu0 0
    %308 = vmatprep.mubr.bf16.mxu0 0
    %309 = vmatmul.mubr.bf16.gmra.mrb[0].mxu0 %v87
    %v310 = vpop.f32.mrb[0].mxu0
    %v311 = vadd.f32 %v270, %v310
    %v312 = vpop.f32.mrb[0].mxu0
    %v313 = vpop.f32.mrb[0].mxu0
    %v314 = vadd.f32 %v273, %v313
    %v315 = vpop.f32.mrb[0].mxu0
    %316 = vdwg.mxu0
    %vm317 = vcmask 785408
    %318 = vst.msk [vmem:[#allocation2] sm:$0xff] %vm317, %v311
    %319 = vst.msk [vmem:[#allocation2 + $0x8] sm:$0xff] %vm317, %v314
    // Predicated region
    $region14: #{tpu_custom_call.1} parent=1 // pred_check
      _
    $region15: #{tpu_custom_call.1} parent=1 // pred_check_branch
      %321 = sbr.rel (0) target = $region17
    $region16: #{tpu_custom_call.1} parent=1 // pred_region
      %s323 = ssub.s32 256, 256
      %324 = vsyncadd [#allocation3], %s323
      %s325 = sshll.u32 [#allocation2], 4
      %s326 = int_to_ptr.vmem [resolvable:$true] %s325
      %331 = dma.vmem_to_hbm [thread:$0]  %s326, 256, %s3, [#allocation3], 128, 128, 8
    $region17: #{tpu_custom_call.1} parent=1 // pred_fallthru
      _
    // Predicated region
    $region18: #{tpu_custom_call.1} parent=1 // pred_check
      _
    $region19: #{tpu_custom_call.1} parent=1 // pred_check_branch
      %333 = sbr.rel (0) target = $region21
    $region20: #{tpu_custom_call.1} parent=1 // pred_region
      %334 = dma.done [#allocation3], 256
    $region21: #{tpu_custom_call.1} parent=1 // pred_fallthru
      _
    %335 = vsyncpa [#allocation3], 1

</llo_original>
